<compile_context>
chip_gen: v7x
topology: tpu7x:2x2x1
jax: 0.10.0
libtpu: 0.0.40
codegen_flags: <defaults>
</compile_context>

<pallas_src>
import functools

import jax
import jax.numpy as jnp
from jax.experimental import pallas as pl
from jax.experimental.pallas import tpu as pltpu


def _round_up(x: int, m: int) -> int:
    return (x + m - 1) // m * m


def _cdiv(a: int, b: int) -> int:
    return -(-a // b)


def _sublane_mult(itemsize: int) -> int:
    # 32-bit: 8 sublanes; 16-bit packs 2/sublane -> 16; 8-bit -> 32.
    return {4: 8, 2: 16, 1: 32}.get(itemsize, 8)


@functools.lru_cache(maxsize=1)
def _vmem_budget_bytes() -> int:
    """Generation-aware usable-VMEM budget for this kernel."""
    cap = 64 * 1024 * 1024  # conservative default: v7x per-TC VMEM
    try:
        cap = int(pltpu.get_tpu_info().vmem_capacity_bytes)
    except Exception:
        pass
    # ~100 MiB usable on 128-MiB chips (v5e/v6e); keep a 48 MiB cap on v7x.
    return 100 * 1024 * 1024 if cap >= 100 * 1024 * 1024 else 48 * 1024 * 1024


def _decoder_kernel(x_ref, w1_ref, b1_ref, w2_ref, b2_ref, out_ref):
    # Linear 1 + ReLU.  MXU matmul with f32 accumulation.
    h = jnp.dot(x_ref[...], w1_ref[...], preferred_element_type=jnp.float32)
    h = jnp.maximum(h + b1_ref[...], 0.0)                  # (TILE_B,H)+(1,H)
    # Linear 2.  Cast the activation to the weight dtype so bf16-stored
    # weights feed the MXU in bf16 (intentional down-cast in that case).
    y = jnp.dot(h.astype(w2_ref.dtype), w2_ref[...],
                preferred_element_type=jnp.float32)
    y = y + b2_ref[...]                                    # (TILE_B,Op)+(1,Op)
    # sigmoid(y) = 1 / (1 + exp(-y)); exp and the approximate reciprocal both
    # run on the EUP slot, leaving VALU slots free for the epilogue.
    sig = pl.reciprocal(1.0 + jnp.exp(-y), approx=True)
    out_ref[...] = sig.astype(out_ref.dtype)


@functools.partial(jax.jit, static_argnames=("out_dim", "out_dtype", "tile_b"))
def decoder_forward(x, w1, b1, w2, b2, *, out_dim=None, out_dtype=None,
                    tile_b=None):
    """VAE decoder forward.

    x : (B, latent)          w1: (latent, hidden)     b1: (1, hidden)
    w2: (hidden, out_pad)    b2: (1, out_pad)   (pre-padded to 128-lane mult)
    out_dim   : true number of output features (default: w2.shape[1]).
    out_dtype : output store dtype (default: x.dtype).  bf16 halves writeback.
    tile_b    : batch-tile override; default derives from the VMEM budget.
    Returns (B, out_dim) in out_dtype.
    """
    B, latent = x.shape
    hidden = w1.shape[1]
    out_cols = w2.shape[1]
    out_dim = out_cols if out_dim is None else int(out_dim)
    out_dtype = x.dtype if out_dtype is None else jnp.dtype(out_dtype)

    # ---- lane-dense output columns (fallback; normally pre-padded at init) --
    out_pad = _round_up(out_cols, 128)
    if out_pad != out_cols:
        # Slow path: per-call pad re-reads the weights every forward.
        w2 = jnp.pad(w2, ((0, 0), (0, out_pad - out_cols)))
        b2 = jnp.pad(b2, ((0, 0), (0, out_pad - out_cols)))

    # ---- batch tiling (VMEM-budget derived, dtype-aware, megacore-aware) ----
    in_isz = jnp.dtype(x.dtype).itemsize
    w_isz = jnp.dtype(w1.dtype).itemsize
    out_isz = jnp.dtype(out_dtype).itemsize
    sub = max(_sublane_mult(in_isz), _sublane_mult(out_isz))

    budget = _vmem_budget_bytes()
    # Per-row VMEM: double-buffered x/out tiles + f32 intermediates.
    per_row = (2 * latent * in_isz + 2 * out_pad * out_isz
               + hidden * 4 + out_pad * 4)
    resident = (latent * hidden + hidden + hidden * out_pad + out_pad) * w_isz
    rows_fit = max(sub, ((budget // 2 - resident) // per_row) // sub * sub)

    target = 2048 if tile_b is None else max(sub, _round_up(int(tile_b), sub))
    tile = min(target, rows_fit, max(sub, _round_up(B, sub)))
    # Guarantee >=2 grid tiles when there is enough work so the "parallel"
    # batch axis can shard across v7x's two TensorCores.
    if _cdiv(B, tile) < 2 and B > 2 * sub:
        tile = max(sub, _round_up(_cdiv(B, 2), sub))
    # Rebalance so the trailing (clipped) tile isn't mostly wasted rows.
    nt = _cdiv(B, tile)
    tile = max(sub, _round_up(_cdiv(B, nt), sub))
    num_tiles = _cdiv(B, tile)

    est = tile * per_row + resident
    vmem_limit = int(min(budget, max(32 * 1024 * 1024, 2 * est)))

    out = pl.pallas_call(
        _decoder_kernel,
        out_shape=jax.ShapeDtypeStruct((B, out_pad), out_dtype),
        grid_spec=pltpu.PrefetchScalarGridSpec(
            num_scalar_prefetch=0,
            grid=(num_tiles,),
            in_specs=[
                pl.BlockSpec((tile, latent), lambda i: (i, 0)),     # x tile
                pl.BlockSpec((latent, hidden), lambda i: (0, 0)),   # resident
                pl.BlockSpec((1, hidden), lambda i: (0, 0)),        # resident
                pl.BlockSpec((hidden, out_pad), lambda i: (0, 0)),  # resident
                pl.BlockSpec((1, out_pad), lambda i: (0, 0)),       # resident
            ],
            out_specs=pl.BlockSpec((tile, out_pad), lambda i: (i, 0)),
        ),
        compiler_params=pltpu.CompilerParams(
            dimension_semantics=("parallel",),   # independent batch tiles
            vmem_limit_bytes=vmem_limit,
        ),
    )(x, w1, b1, w2, b2)

    # TODO(synk): if hidden_dim grows to the thousands, add a K-reduction grid
    # axis with an f32 VMEM accumulator instead of keeping (tile, hidden) live.
    return out[:, :out_dim] if out_dim != out_pad else out


def init_decoder_params(key, latent_dim, hidden_dim, output_dim,
                        dtype=jnp.float32):
    """PyTorch nn.Linear-style init (uniform(-1/sqrt(fan_in), +1/sqrt(fan_in))).

    Weights are stored transposed as (in_features, out_features) so the kernel
    computes x @ W, and the output layer is pre-padded ONCE to a multiple of
    128 output columns (lane-dense stores, no per-call jnp.pad).
    """
    k1, k2, k3, k4 = jax.random.split(key, 4)
    lim1 = 1.0 / float(latent_dim) ** 0.5
    lim2 = 1.0 / float(hidden_dim) ** 0.5
    out_pad = _round_up(output_dim, 128)
    w1 = jax.random.uniform(k1, (latent_dim, hidden_dim), dtype, -lim1, lim1)
    b1 = jax.random.uniform(k2, (1, hidden_dim), dtype, -lim1, lim1)
    w2 = jax.random.uniform(k3, (hidden_dim, output_dim), dtype, -lim2, lim2)
    b2 = jax.random.uniform(k4, (1, output_dim), dtype, -lim2, lim2)
    w2 = jnp.pad(w2, ((0, 0), (0, out_pad - output_dim)))
    b2 = jnp.pad(b2, ((0, 0), (0, out_pad - output_dim)))
    return w1, b1, w2, b2


def _reference(x, w1, b1, w2, b2):
    h = jnp.maximum(x @ w1 + b1, 0.0)
    return jax.nn.sigmoid(h @ w2 + b2)


if __name__ == "__main__":
    key = jax.random.PRNGKey(0)

    # --- Small shapes consistent with the module's forward. -----------------
    batch, latent_dim, hidden_dim, output_dim = 8, 16, 32, 64
    kx, kp, key = jax.random.split(key, 3)
    x = jax.random.normal(kx, (batch, latent_dim), jnp.float32)
    w1, b1, w2, b2 = init_decoder_params(kp, latent_dim, hidden_dim, output_dim)

    out = jax.block_until_ready(
        decoder_forward(x, w1, b1, w2, b2, out_dim=output_dim))
    ref = _reference(x, w1, b1, w2, b2)[:, :output_dim]
    assert out.shape == (batch, output_dim)
    # Approx-reciprocal sigmoid: structural check at 5e-3 abs on a [0,1] output.
    assert jnp.allclose(out, ref, atol=5e-3, rtol=0.0)

    # --- Multi-tile path + trailing partial block (MNIST-like output dim). --
    batch2, out2 = 200, 28 * 28
    kx2, kp2 = jax.random.split(key)
    x2 = jax.random.normal(kx2, (batch2, latent_dim), jnp.float32)
    p2 = init_decoder_params(kp2, latent_dim, hidden_dim, out2)

    out_b = jax.block_until_ready(
        decoder_forward(x2, *p2, out_dim=out2, tile_b=64))
    ref_b = _reference(x2, *p2)[:, :out2]
    assert out_b.shape == (batch2, out2)
    assert jnp.allclose(out_b, ref_b, atol=5e-3, rtol=0.0)

    # --- Default (VMEM-derived) tiling + bf16 output store (halves writeback).
    out_c = jax.block_until_ready(
        decoder_forward(x2, *p2, out_dim=out2, out_dtype=jnp.bfloat16))
    assert out_c.shape == (batch2, out2) and out_c.dtype == jnp.bfloat16
    assert jnp.allclose(out_c.astype(jnp.float32), ref_b, atol=2e-2, rtol=0.0)

    print("KERNEL_OK")
</pallas_src>

<mosaic_0001>
module attributes {stable_mosaic.version = 11 : i64} {
  func.func @_decoder_kernel(%arg0: i32, %arg1: memref<8x16xf32, #tpu.memory_space<vmem>>, %arg2: memref<16x32xf32, #tpu.memory_space<vmem>>, %arg3: memref<1x32xf32, #tpu.memory_space<vmem>>, %arg4: memref<32x128xf32, #tpu.memory_space<vmem>>, %arg5: memref<1x128xf32, #tpu.memory_space<vmem>>, %arg6: memref<8x128xf32, #tpu.memory_space<vmem>>) attributes {dimension_semantics = [#tpu.dimension_semantics<parallel>], iteration_bounds = array<i64: 1>, scalar_prefetch = 0 : i64, scratch_operands = 0 : i64, tpu.core_type = #tpu.core_type<tc>, window_params = [{transform_indices = @transform_0, window_bounds = array<i64: 8, 16>}, {pipeline_mode = #tpu.pipeline_mode<synchronous>, transform_indices = @transform_1, window_bounds = array<i64: 16, 32>}, {pipeline_mode = #tpu.pipeline_mode<synchronous>, transform_indices = @transform_2, window_bounds = array<i64: 1, 32>}, {pipeline_mode = #tpu.pipeline_mode<synchronous>, transform_indices = @transform_3, window_bounds = array<i64: 32, 128>}, {pipeline_mode = #tpu.pipeline_mode<synchronous>, transform_indices = @transform_4, window_bounds = array<i64: 1, 128>}, {transform_indices = @transform_5, window_bounds = array<i64: 8, 128>}]} {
    %c0 = arith.constant 0 : index
    %c0_0 = arith.constant 0 : index
    %0 = vector.load %arg1[%c0, %c0_0] : memref<8x16xf32, #tpu.memory_space<vmem>>, vector<8x16xf32>
    %c0_1 = arith.constant 0 : index
    %c0_2 = arith.constant 0 : index
    %1 = vector.load %arg2[%c0_1, %c0_2] : memref<16x32xf32, #tpu.memory_space<vmem>>, vector<16x32xf32>
    %cst = arith.constant dense<0.000000e+00> : vector<8x32xf32>
    %2 = tpu.matmul %0, %1, %cst {dimension_numbers = #tpu.dot_dimension_numbers<[1], [0], [0], [1], [0, 0, 1, 1], [], []>} : vector<8x16xf32>, vector<16x32xf32>, vector<8x32xf32> -> vector<8x32xf32>
    %c0_3 = arith.constant 0 : index
    %c0_4 = arith.constant 0 : index
    %3 = vector.load %arg3[%c0_3, %c0_4] : memref<1x32xf32, #tpu.memory_space<vmem>>, vector<1x32xf32>
    %4 = vector.broadcast %3 : vector<1x32xf32> to vector<8x32xf32>
    %5 = arith.addf %2, %4 : vector<8x32xf32>
    %cst_5 = arith.constant 0.000000e+00 : f32
    %6 = vector.broadcast %cst_5 : f32 to vector<8x32xf32>
    %7 = arith.maximumf %5, %6 : vector<8x32xf32>
    %c0_6 = arith.constant 0 : index
    %c0_7 = arith.constant 0 : index
    %8 = vector.load %arg4[%c0_6, %c0_7] : memref<32x128xf32, #tpu.memory_space<vmem>>, vector<32x128xf32>
    %cst_8 = arith.constant dense<0.000000e+00> : vector<8x128xf32>
    %9 = tpu.matmul %7, %8, %cst_8 {dimension_numbers = #tpu.dot_dimension_numbers<[1], [0], [0], [1], [0, 0, 1, 1], [], []>} : vector<8x32xf32>, vector<32x128xf32>, vector<8x128xf32> -> vector<8x128xf32>
    %c0_9 = arith.constant 0 : index
    %c0_10 = arith.constant 0 : index
    %10 = vector.load %arg5[%c0_9, %c0_10] : memref<1x128xf32, #tpu.memory_space<vmem>>, vector<1x128xf32>
    %11 = vector.broadcast %10 : vector<1x128xf32> to vector<8x128xf32>
    %12 = arith.addf %9, %11 : vector<8x128xf32>
    %cst_11 = arith.constant 0.000000e+00 : f32
    %13 = vector.broadcast %cst_11 : f32 to vector<8x128xf32>
    %14 = arith.subf %13, %12 : vector<8x128xf32>
    %15 = math.exp %14 : vector<8x128xf32>
    %cst_12 = arith.constant 1.000000e+00 : f32
    %16 = vector.broadcast %cst_12 : f32 to vector<8x128xf32>
    %17 = arith.addf %16, %15 : vector<8x128xf32>
    %18 = tpu.reciprocal %17 {approx = true} : vector<8x128xf32> -> vector<8x128xf32>
    %c0_13 = arith.constant 0 : index
    %c0_14 = arith.constant 0 : index
    %19 = vector.load %arg6[%c0_13, %c0_14] : memref<8x128xf32, #tpu.memory_space<vmem>>, vector<8x128xf32>
    tpu.vector_store %arg6[%c0_13, %c0_14], %18 {strides = array<i32>} : memref<8x128xf32, #tpu.memory_space<vmem>>, vector<8x128xf32>,
    return
  }
  func.func @transform_0(%arg0: i32) -> (i32, i32) {
    %c0_i32 = arith.constant 0 : i32
    %c0_i32_0 = arith.constant 0 : i32
    return %arg0, %c0_i32 : i32, i32
  }
  func.func @transform_1(%arg0: i32) -> (i32, i32) {
    %c0_i32 = arith.constant 0 : i32
    %c0_i32_0 = arith.constant 0 : i32
    %c0_i32_1 = arith.constant 0 : i32
    return %c0_i32, %c0_i32_0 : i32, i32
  }
  func.func @transform_2(%arg0: i32) -> (i32, i32) {
    %c0_i32 = arith.constant 0 : i32
    %c0_i32_0 = arith.constant 0 : i32
    %c0_i32_1 = arith.constant 0 : i32
    return %c0_i32, %c0_i32_0 : i32, i32
  }
  func.func @transform_3(%arg0: i32) -> (i32, i32) {
    %c0_i32 = arith.constant 0 : i32
    %c0_i32_0 = arith.constant 0 : i32
    %c0_i32_1 = arith.constant 0 : i32
    return %c0_i32, %c0_i32_0 : i32, i32
  }
  func.func @transform_4(%arg0: i32) -> (i32, i32) {
    %c0_i32 = arith.constant 0 : i32
    %c0_i32_0 = arith.constant 0 : i32
    %c0_i32_1 = arith.constant 0 : i32
    return %c0_i32, %c0_i32_0 : i32, i32
  }
  func.func @transform_5(%arg0: i32) -> (i32, i32) {
    %c0_i32 = arith.constant 0 : i32
    %c0_i32_0 = arith.constant 0 : i32
    return %arg0, %c0_i32 : i32, i32
  }
}

</mosaic_0001>

<llo_original>
// kernel: decoder_forward.1
$region0: #{decoder_forward.1}
  #allocation0 [shape = 'u32[]', space=smem, size = 0x4, offset = 0x4, fixed_abs, tag = 'smem constant byte address 0x4 - core index']
  #allocation1 [shape = 'u32[144,128]{1,0:T(1,128)}', space=vmem, size = 0x12000, scoped, tag = 'internal scratch']
  %s0 = inlined_call_operand.hbm [shape: f32[8,16], index: 0, kind: input, shape index: {}]
  %s1 = inlined_call_operand.hbm [shape: f32[16,32], index: 1, kind: input, shape index: {}]
  %s2 = inlined_call_operand.vmem [shape: f32[1,32], index: 2, kind: input, shape index: {}]
  %s3 = inlined_call_operand.hbm [shape: f32[32,128], index: 3, kind: input, shape index: {}]
  %s4 = inlined_call_operand.vmem [shape: f32[1,128], index: 4, kind: input, shape index: {}]
  %s5 = inlined_call_operand.hbm [shape: f32[8,128], index: 5, kind: output, shape index: {}]
  %s6 = sld [smem:[#allocation0]]
  $region42: #{decoder_forward.1} parent=0
    _
  %s8 = ssub.s32 1, %s6
  %s9 = scalar_select 0, %s8, %s6
  $region1: #{decoder_forward.1} parent=0
    #allocation2 [shape = 'u8[4096]{0}', space=vmem, size = 0x1000, scoped, tag = 'input window, operand 0, single buffered']
    #allocation3 [shape = 's32[1]{0}', space=sflag, size = 0x4, scoped, tag = 'scoped memory for decoder_forward.1']
    #allocation4 [shape = 's32[1]{0}', space=sflag, size = 0x4, scoped, tag = 'scoped memory for decoder_forward.1']
    #allocation5 [shape = 'u8[8192]{0}', space=vmem, size = 0x2000, scoped, tag = 'input window, operand 1, single buffered']
    #allocation6 [shape = 's32[1]{0}', space=sflag, size = 0x4, scoped, tag = 'scoped memory for decoder_forward.1']
    #allocation7 [shape = 'u8[16384]{0}', space=vmem, size = 0x4000, scoped, tag = 'input window, operand 3, single buffered']
    #allocation8 [shape = 'u8[4096]{0}', space=vmem, size = 0x1000, scoped, tag = 'output window, operand 0, single buffered']
    %10 = vsyncpa [#allocation3], 0
    %11 = vsyncpa [#allocation6], 0
    %12 = vsyncpa [#allocation4], 0
    // Predicated region
    $region2: #{decoder_forward.1} parent=1 // pred_check
      _
    $region3: #{decoder_forward.1} parent=1 // pred_check_branch
      %14 = sbr.rel (0) target = $region5
    $region4: #{decoder_forward.1} parent=1 // pred_region
      %s16 = ssub.s32 128, 128
      %17 = vsyncadd [#allocation3], %s16
      %s19 = sshll.u32 [#allocation2], 4
      %s20 = int_to_ptr.vmem [resolvable:$true] %s19
      %22 = dma.hbm_to_vmem [thread:$0]  %s0, 128, %s20, [#allocation3]
    $region5: #{decoder_forward.1} parent=1 // pred_fallthru
      _
    // Predicated region
    $region6: #{decoder_forward.1} parent=1 // pred_check
      _
    $region7: #{decoder_forward.1} parent=1 // pred_check_branch
      %24 = sbr.rel (0) target = $region9
    $region8: #{decoder_forward.1} parent=1 // pred_region
      %s26 = ssub.s32 256, 256
      %27 = vsyncadd [#allocation6], %s26
      %s28 = sshll.u32 [#allocation5], 4
      %s29 = int_to_ptr.vmem [resolvable:$true] %s28
      %34 = dma.hbm_to_vmem [thread:$0]  %s1, 256, %s29, [#allocation6], 128, 128, 8
    $region9: #{decoder_forward.1} parent=1 // pred_fallthru
      _
    // Predicated region
    $region10: #{decoder_forward.1} parent=1 // pred_check
      _
    $region11: #{decoder_forward.1} parent=1 // pred_check_branch
      %36 = sbr.rel (0) target = $region13
    $region12: #{decoder_forward.1} parent=1 // pred_region
      _
    $region13: #{decoder_forward.1} parent=1 // pred_fallthru
      _
    // Predicated region
    $region14: #{decoder_forward.1} parent=1 // pred_check
      _
    $region15: #{decoder_forward.1} parent=1 // pred_check_branch
      %38 = sbr.rel (0) target = $region17
    $region16: #{decoder_forward.1} parent=1 // pred_region
      %s40 = ssub.s32 512, 512
      %41 = vsyncadd [#allocation6], %s40
      %s42 = sshll.u32 [#allocation7], 4
      %s43 = int_to_ptr.vmem [resolvable:$true] %s42
      %48 = dma.hbm_to_vmem [thread:$0]  %s3, 512, %s43, [#allocation6], 128, 128, 8
    $region17: #{decoder_forward.1} parent=1 // pred_fallthru
      _
    // Predicated region
    $region18: #{decoder_forward.1} parent=1 // pred_check
      _
    $region19: #{decoder_forward.1} parent=1 // pred_check_branch
      %50 = sbr.rel (0) target = $region21
    $region20: #{decoder_forward.1} parent=1 // pred_region
      _
    $region21: #{decoder_forward.1} parent=1 // pred_fallthru
      _
    // Predicated region
    $region22: #{decoder_forward.1} parent=1 // pred_check
      _
    $region23: #{decoder_forward.1} parent=1 // pred_check_branch
      %52 = sbr.rel (0) target = $region25
    $region24: #{decoder_forward.1} parent=1 // pred_region
      %53 = dma.done [#allocation3], 128
    $region25: #{decoder_forward.1} parent=1 // pred_fallthru
      _
    // Predicated region
    $region26: #{decoder_forward.1} parent=1 // pred_check
      _
    $region27: #{decoder_forward.1} parent=1 // pred_check_branch
      %55 = sbr.rel (0) target = $region29
    $region28: #{decoder_forward.1} parent=1 // pred_region
      %56 = dma.done [#allocation6], 256
    $region29: #{decoder_forward.1} parent=1 // pred_fallthru
      _
    // Predicated region
    $region30: #{decoder_forward.1} parent=1 // pred_check
      _
    $region31: #{decoder_forward.1} parent=1 // pred_check_branch
      %58 = sbr.rel (0) target = $region33
    $region32: #{decoder_forward.1} parent=1 // pred_region
      %59 = dma.done [#allocation6], 512
    $region33: #{decoder_forward.1} parent=1 // pred_fallthru
      _
    %v60 = vld [vmem:[#allocation2] sm:$0xff]
    %v61 = vld [vmem:[#allocation5] sm:$0xff]
    %v62 = vld [vmem:[#allocation5 + $0x8] sm:$0xff]
    %v63 = vld [vmem:[%s2] sm:$0x1]
    %v65 = vlaneseq
    %v66 = vshrl.u32 %v65, 7
    %v67 = vsub.s32 0, %v66
    %v68 = vrot.slane %v63, %v67
    %vm70 = vcmask 130048
    %v72 = vsel %vm70, %v60, 0
    %74 = vmatprep.subr.mxu0 0.0
    %75 = vmatpush1.msra.mxu0 %v61
    %76 = vmatprep.subr.mxu0 0.0
    %77 = vmatpush1.msra.mxu0 %v62
    %78 = vmatprep.subr.mxu0 0.0
    %79 = vmatpush1.msra.mxu0 0.0
    %80 = vmatprep.subr.mxu0 0.0
    %81 = vmatpush1.msra.mxu0 0.0
    %82 = vmatprep.subr.mxu0 0.0
    %83 = vmatpush1.msra.mxu0 0.0
    %84 = vmatprep.subr.mxu0 0.0
    %85 = vmatpush1.msra.mxu0 0.0
    %86 = vmatprep.subr.mxu0 0.0
    %87 = vmatpush1.msra.mxu0 0.0
    %88 = vmatprep.subr.mxu0 0.0
    %89 = vmatpush1.msra.mxu0 0.0
    %90 = vmatprep.subr.mxu0 0.0
    %91 = vmatpush1.msra.mxu0 0.0
    %92 = vmatprep.subr.mxu0 0.0
    %93 = vmatpush1.msra.mxu0 0.0
    %94 = vmatprep.subr.mxu0 0.0
    %95 = vmatpush1.msra.mxu0 0.0
    %96 = vmatprep.subr.mxu0 0.0
    %97 = vmatpush1.msra.mxu0 0.0
    %98 = vmatprep.subr.mxu0 0.0
    %99 = vmatpush1.msra.mxu0 0.0
    %100 = vmatprep.subr.mxu0 0.0
    %101 = vmatpush1.msra.mxu0 0.0
    %102 = vmatprep.subr.mxu0 0.0
    %103 = vmatpush1.msra.mxu0 0.0
    %104 = vmatprep.subr.mxu0 0.0
    %105 = vmatpush1.msra.mxu0 0.0
    %106 = vmatprep.subr.mxu0 0.0
    %107 = vmatpush1.msra.mxu0 0.0
    %108 = vmatprep.subr.mxu0 0.0
    %109 = vmatpush1.msra.mxu0 0.0
    %110 = vmatprep.subr.mxu0 0.0
    %111 = vmatpush1.msra.mxu0 0.0
    %112 = vmatprep.subr.mxu0 0.0
    %113 = vmatpush1.msra.mxu0 0.0
    %114 = vmatprep.subr.mxu0 0.0
    %115 = vmatpush1.msra.mxu0 0.0
    %116 = vmatprep.subr.mxu0 0.0
    %117 = vmatpush1.msra.mxu0 0.0
    %118 = vmatprep.subr.mxu0 0.0
    %119 = vmatpush1.msra.mxu0 0.0
    %120 = vmatprep.subr.mxu0 0.0
    %121 = vmatpush1.msra.mxu0 0.0
    %122 = vmatprep.subr.mxu0 0.0
    %123 = vmatpush1.msra.mxu0 0.0
    %124 = vmatprep.subr.mxu0 0.0
    %125 = vmatpush1.msra.mxu0 0.0
    %126 = vmatprep.subr.mxu0 0.0
    %127 = vmatpush1.msra.mxu0 0.0
    %128 = vmatprep.subr.mxu0 0.0
    %129 = vmatpush1.msra.mxu0 0.0
    %130 = vmatprep.subr.mxu0 0.0
    %131 = vmatpush1.msra.mxu0 0.0
    %132 = vmatprep.subr.mxu0 0.0
    %133 = vmatpush1.msra.mxu0 0.0
    %134 = vmatprep.subr.mxu0 0.0
    %135 = vmatpush1.msra.mxu0 0.0
    %136 = vmatprep.subr.mxu0 0.0
    %137 = vmatpush1.msra.mxu0 0.0
    %138 = vmatprep.mubr.f32.mxu0 0.0
    %139 = vmatmul.mubr.f32.gmra.mrb[0].mxu0 %v72
    %v140 = vpop.f32.mrb[0].mxu0
    %v141 = vadd.f32 %v68, %v140
    %v142 = vpop.f32.mrb[0].mxu0
    %143 = vdwg.mxu0
    %v144 = vmax.f32 %v141, 0.0
    %v145 = vld [vmem:[#allocation7] sm:$0xff]
    %v146 = vld [vmem:[#allocation7 + $0x8] sm:$0xff]
    %v147 = vld [vmem:[#allocation7 + $0x10] sm:$0xff]
    %v148 = vld [vmem:[#allocation7 + $0x18] sm:$0xff]
    %v149 = vld [vmem:[%s4] sm:$0x1]
    %v151 = vlaneseq
    %v152 = vshrl.u32 %v151, 7
    %v153 = vsub.s32 0, %v152
    %v154 = vrot.slane %v149, %v153
    %vm156 = vcmask 261120
    %v158 = vsel %vm156, %v144, 0
    %160 = vmatprep.subr.mxu0 0.0
    %161 = vmatpush1.msra.mxu0 %v145
    %162 = vmatprep.subr.mxu0 0.0
    %163 = vmatpush1.msra.mxu0 %v146
    %164 = vmatprep.subr.mxu0 0.0
    %165 = vmatpush1.msra.mxu0 %v147
    %166 = vmatprep.subr.mxu0 0.0
    %167 = vmatpush1.msra.mxu0 %v148
    %168 = vmatprep.subr.mxu0 0.0
    %169 = vmatpush1.msra.mxu0 0.0
    %170 = vmatprep.subr.mxu0 0.0
    %171 = vmatpush1.msra.mxu0 0.0
    %172 = vmatprep.subr.mxu0 0.0
    %173 = vmatpush1.msra.mxu0 0.0
    %174 = vmatprep.subr.mxu0 0.0
    %175 = vmatpush1.msra.mxu0 0.0
    %176 = vmatprep.subr.mxu0 0.0
    %177 = vmatpush1.msra.mxu0 0.0
    %178 = vmatprep.subr.mxu0 0.0
    %179 = vmatpush1.msra.mxu0 0.0
    %180 = vmatprep.subr.mxu0 0.0
    %181 = vmatpush1.msra.mxu0 0.0
    %182 = vmatprep.subr.mxu0 0.0
    %183 = vmatpush1.msra.mxu0 0.0
    %184 = vmatprep.subr.mxu0 0.0
    %185 = vmatpush1.msra.mxu0 0.0
    %186 = vmatprep.subr.mxu0 0.0
    %187 = vmatpush1.msra.mxu0 0.0
    %188 = vmatprep.subr.mxu0 0.0
    %189 = vmatpush1.msra.mxu0 0.0
    %190 = vmatprep.subr.mxu0 0.0
    %191 = vmatpush1.msra.mxu0 0.0
    %192 = vmatprep.subr.mxu0 0.0
    %193 = vmatpush1.msra.mxu0 0.0
    %194 = vmatprep.subr.mxu0 0.0
    %195 = vmatpush1.msra.mxu0 0.0
    %196 = vmatprep.subr.mxu0 0.0
    %197 = vmatpush1.msra.mxu0 0.0
    %198 = vmatprep.subr.mxu0 0.0
    %199 = vmatpush1.msra.mxu0 0.0
    %200 = vmatprep.subr.mxu0 0.0
    %201 = vmatpush1.msra.mxu0 0.0
    %202 = vmatprep.subr.mxu0 0.0
    %203 = vmatpush1.msra.mxu0 0.0
    %204 = vmatprep.subr.mxu0 0.0
    %205 = vmatpush1.msra.mxu0 0.0
    %206 = vmatprep.subr.mxu0 0.0
    %207 = vmatpush1.msra.mxu0 0.0
    %208 = vmatprep.subr.mxu0 0.0
    %209 = vmatpush1.msra.mxu0 0.0
    %210 = vmatprep.subr.mxu0 0.0
    %211 = vmatpush1.msra.mxu0 0.0
    %212 = vmatprep.subr.mxu0 0.0
    %213 = vmatpush1.msra.mxu0 0.0
    %214 = vmatprep.subr.mxu0 0.0
    %215 = vmatpush1.msra.mxu0 0.0
    %216 = vmatprep.subr.mxu0 0.0
    %217 = vmatpush1.msra.mxu0 0.0
    %218 = vmatprep.subr.mxu0 0.0
    %219 = vmatpush1.msra.mxu0 0.0
    %220 = vmatprep.subr.mxu0 0.0
    %221 = vmatpush1.msra.mxu0 0.0
    %222 = vmatprep.subr.mxu0 0.0
    %223 = vmatpush1.msra.mxu0 0.0
    %224 = vmatprep.mubr.f32.mxu0 0.0
    %225 = vmatmul.mubr.f32.gmra.mrb[0].mxu0 %v158
    %v226 = vpop.f32.mrb[0].mxu0
    %v227 = vadd.f32 %v154, %v226
    %v228 = vpop.f32.mrb[0].mxu0
    %229 = vdwg.mxu0
    %v230 = vsub.f32 0.0, %v227
    %v231 = vmul.f32 %v230, 1.442695
    %v232 = vpow.pop %v231
    %v233 = vadd.f32 %v232, 1.0
    %v234 = vrcp.pop %v233
    %235 = vst [vmem:[#allocation8] sm:$0xff] %v234
    // Predicated region
    $region34: #{decoder_forward.1} parent=1 // pred_check
      _
    $region35: #{decoder_forward.1} parent=1 // pred_check_branch
      %237 = sbr.rel (0) target = $region37
    $region36: #{decoder_forward.1} parent=1 // pred_region
      %s239 = ssub.s32 128, 128
      %240 = vsyncadd [#allocation4], %s239
      %s242 = sshll.u32 [#allocation8], 4
      %s243 = int_to_ptr.vmem [resolvable:$true] %s242
      %245 = dma.vmem_to_hbm [thread:$0]  %s243, 128, %s5, [#allocation4]
    $region37: #{decoder_forward.1} parent=1 // pred_fallthru
      _
    // Predicated region
    $region38: #{decoder_forward.1} parent=1 // pred_check
      _
    $region39: #{decoder_forward.1} parent=1 // pred_check_branch
      %247 = sbr.rel (0) target = $region41
    $region40: #{decoder_forward.1} parent=1 // pred_region
      %248 = dma.done [#allocation4], 128
    $region41: #{decoder_forward.1} parent=1 // pred_fallthru
      _
    %249 = vsyncpa [#allocation3], 1
    %250 = vsyncpa [#allocation6], 1
    %251 = vsyncpa [#allocation4], 1

</llo_original>
